<compile_context>
chip_gen: v5e
topology: v5e:2x2
jax: 0.10.0
libtpu: 0.0.40
codegen_flags: <defaults>
</compile_context>

<pallas_src>
import functools

import jax
import jax.numpy as jnp
from jax.experimental import pallas as pl
from jax.experimental.pallas import tpu as pltpu


def _ensemble_kernel(hist_ref, invn_ref, emb_ref, w_ref, b_ref, out_ref, acc_ref,
                     *, num_models):
    """One invocation per batch tile; the ensemble loop is statically unrolled."""
    acc_ref[...] = jnp.zeros_like(acc_ref)
    hist = hist_ref[...]           # (tb, V)  bf16 masked token counts (exact ints)
    inv_n = invn_ref[...]          # (tb, 1)  f32  1 / num_valid_tokens

    for m in range(num_models):    # static unroll (M is small)
        # Fused feature extraction: masked mean pooling == (hist @ emb) * inv_n.
        feats = jnp.dot(hist, emb_ref[m],
                        preferred_element_type=jnp.float32) * inv_n        # (tb, H) f32
        # Classifier head: logits = feats @ W + b (bf16 MXU inputs, f32 accumulate).
        logits = jnp.dot(feats.astype(jnp.bfloat16), w_ref[m],
                         preferred_element_type=jnp.float32) + b_ref[m]    # (tb, Cpad)
        # Numerically stable softmax; padded classes carry bias -1e30 -> prob 0.
        mx = jnp.max(logits, axis=-1, keepdims=True)
        e = jnp.exp(logits - mx)
        # Exact reciprocal (plain division): EUP is not the bottleneck here and this
        # keeps argmax parity with the reference on near-ties.
        sm = e / jnp.sum(e, axis=-1, keepdims=True)
        acc_ref[...] += sm

    # argmax of the summed softmax == argmax of the mean (skip the 1/M multiply).
    # First-occurrence tie-break matches torch.argmax / jnp.argmax.
    acc = acc_ref[...]
    tb, c = acc.shape
    idx = jax.lax.broadcasted_iota(jnp.int32, (tb, c), 1)
    row_max = jnp.max(acc, axis=-1, keepdims=True)
    pred = jnp.min(jnp.where(acc == row_max, idx, c), axis=-1, keepdims=True)  # (tb,1)
    # Broadcast across 128 lanes so the store is an unmasked, lane-dense vst.
    out_ref[...] = jnp.broadcast_to(pred, out_ref.shape).astype(jnp.int32)


def ensemble_predict_pallas(hist, inv_n, emb_tables, cls_w, cls_b, *, batch_tile=256):
    """hist: (B, V) f32 masked token counts; inv_n: (B, 1) f32; emb_tables: (M, V, H);
    cls_w: (M, H, C); cls_b: (M, 1, C).  Returns (B,) int32 argmax class indices."""
    M, V, H = emb_tables.shape
    B = hist.shape[0]
    C = cls_w.shape[-1]

    # Lane-dense classes: pad C to a 128 multiple.  Padded W columns are zero and
    # padded biases a large negative, so padded classes get softmax prob exactly 0.
    C_pad = pl.cdiv(C, 128) * 128
    if C_pad != C:
        cls_w = jnp.pad(cls_w, ((0, 0), (0, 0), (0, C_pad - C)))
        cls_b = jnp.pad(cls_b, ((0, 0), (0, 0), (0, C_pad - C)),
                        constant_values=-1e30)

    # bf16 MXU inputs; f32 accumulation happens inside the kernel.  Bias stays f32
    # so the -1e30 padding sentinel survives exactly.
    hist_bf = hist.astype(jnp.bfloat16)     # small integer counts: exact in bf16
    emb_bf = emb_tables.astype(jnp.bfloat16)
    w_bf = cls_w.astype(jnp.bfloat16)
    b_f32 = cls_b.astype(jnp.float32)
    inv_n = inv_n.astype(jnp.float32)

    # Batch tiling: sublane-aligned tile, batch padded up to a tile multiple.
    tb = min(batch_tile, B)
    tb = ((tb + 7) // 8) * 8
    B_pad = pl.cdiv(B, tb) * tb
    if B_pad != B:
        hist_bf = jnp.pad(hist_bf, ((0, B_pad - B), (0, 0)))
        inv_n = jnp.pad(inv_n, ((0, B_pad - B), (0, 0)))   # zero -> feats 0, discarded

    # Explicit VMEM budget: single-copy resident params + double-buffered streamed
    # tiles + the f32 accumulator scratch, with 2x headroom (capped at v7x's 64 MiB).
    resident = (emb_bf.size + w_bf.size) * 2 + b_f32.size * 4
    streamed = 2 * (tb * V * 2 + tb * 4) + 2 * (tb * 128 * 4)
    scratch = tb * C_pad * 4
    vmem_limit = int(min(64 << 20, max(16 << 20, 2 * (resident + streamed + scratch))))

    out = pl.pallas_call(
        functools.partial(_ensemble_kernel, num_models=M),
        out_shape=jax.ShapeDtypeStruct((B_pad, 128), jnp.int32),
        grid_spec=pltpu.PrefetchScalarGridSpec(
            num_scalar_prefetch=0,
            grid=(B_pad // tb,),
            in_specs=[
                pl.BlockSpec((tb, V), lambda i: (i, 0)),   # token histogram (tiled)
                pl.BlockSpec((tb, 1), lambda i: (i, 0)),   # 1 / n_valid      (tiled)
                # Grid-invariant parameters: untiled, one VMEM-resident copy each
                # (no second pipeline buffer -- their block index never changes).
                pl.BlockSpec(memory_space=pltpu.MemorySpace.VMEM),   # emb tables
                pl.BlockSpec(memory_space=pltpu.MemorySpace.VMEM),   # classifier W
                pl.BlockSpec(memory_space=pltpu.MemorySpace.VMEM),   # classifier b
            ],
            out_specs=pl.BlockSpec((tb, 128), lambda i: (i, 0)),
            scratch_shapes=[pltpu.VMEM((tb, C_pad), jnp.float32)],   # ensemble acc
        ),
        compiler_params=pltpu.CompilerParams(
            dimension_semantics=("parallel",),
            vmem_limit_bytes=vmem_limit,
        ),
    )(hist_bf, inv_n, emb_bf, w_bf, b_f32)
    return out[:B, 0]


def _bag_of_tokens(input_ids, attention_mask, vocab_size):
    """Masked token histogram (B, V) and 1/num_valid (B, 1).  Replaces the
    (M, B, S, H) embedding-gather intermediate with a tiny scatter-add."""
    B = input_ids.shape[0]
    mask = attention_mask.astype(jnp.float32)
    rows = jnp.arange(B, dtype=jnp.int32)[:, None]
    hist = jnp.zeros((B, vocab_size), jnp.float32).at[rows, input_ids].add(mask)
    inv_n = 1.0 / jnp.maximum(jnp.sum(mask, axis=1, keepdims=True), 1.0)
    return hist, inv_n


@jax.jit
def ensemble_forward(input_ids, attention_mask, emb_tables, cls_w, cls_b):
    # TODO(synk): the original module wraps arbitrary HuggingFace classifiers; each
    # member here is a synthetic embedding + masked-mean-pool + linear head with the
    # same (logits -> softmax -> average -> argmax) ensemble contract.
    hist, inv_n = _bag_of_tokens(input_ids, attention_mask, emb_tables.shape[1])
    return ensemble_predict_pallas(hist, inv_n, emb_tables, cls_w, cls_b)


if __name__ == "__main__":
    key = jax.random.PRNGKey(0)
    num_models, vocab, batch, seq, hidden, num_classes = 3, 64, 8, 8, 32, 8

    k_emb, k_w, k_b, k_ids, k_mask = jax.random.split(key, 5)
    emb_tables = jax.random.normal(k_emb, (num_models, vocab, hidden), jnp.float32) * 0.1
    cls_w = jax.random.normal(k_w, (num_models, hidden, num_classes), jnp.float32) * 0.1
    cls_b = jax.random.normal(k_b, (num_models, 1, num_classes), jnp.float32) * 0.01

    input_ids = jax.random.randint(k_ids, (batch, seq), 0, vocab, dtype=jnp.int32)
    attention_mask = (jax.random.uniform(k_mask, (batch, seq)) > 0.2).astype(jnp.int32)
    attention_mask = attention_mask.at[:, 0].set(1)   # >= 1 valid token per row

    preds = ensemble_forward(input_ids, attention_mask, emb_tables, cls_w, cls_b)
    preds = jax.block_until_ready(preds)

    # Faithful plain-JAX f32 reference: gather -> masked mean -> linear -> softmax ->
    # ensemble mean -> argmax (the original torch semantics).
    emb_g = jnp.take(emb_tables, input_ids, axis=1)                    # (M, B, S, H)
    mask = attention_mask.astype(jnp.float32)[None, :, :, None]
    feats = jnp.sum(emb_g * mask, axis=2) / jnp.maximum(jnp.sum(mask, axis=2), 1.0)
    logits = jnp.einsum("mbh,mhc->mbc", feats, cls_w) + cls_b
    avg_sm = jnp.mean(jax.nn.softmax(logits, axis=-1), axis=0)
    ref = jnp.argmax(avg_sm, axis=-1).astype(jnp.int32)

    assert preds.shape == (batch,)
    assert preds.dtype == jnp.int32
    # Tolerance-aware check: the kernel runs both matmuls with bf16 inputs, so accept
    # either an exact index match or a prediction whose averaged f32 probability is
    # within a small margin of the row maximum (the margin is ~10x the worst-case
    # bf16-induced probability error at these scales).
    picked = jnp.take_along_axis(avg_sm, preds[:, None], axis=-1)[:, 0]
    ok = (preds == ref) | (picked >= jnp.max(avg_sm, axis=-1) - 1e-3)
    assert bool(jnp.all(ok))

    print("KERNEL_OK")
</pallas_src>

<mosaic_0001>
module attributes {stable_mosaic.version = 11 : i64} {
  func.func @_ensemble_kernel(%arg0: i32, %arg1: memref<8x64xbf16, #tpu.memory_space<vmem>>, %arg2: memref<8x1xf32, #tpu.memory_space<vmem>>, %arg3: memref<3x64x32xbf16, #tpu.memory_space<vmem>>, %arg4: memref<3x32x128xbf16, #tpu.memory_space<vmem>>, %arg5: memref<3x1x128xf32, #tpu.memory_space<vmem>>, %arg6: memref<8x128xi32, #tpu.memory_space<vmem>>, %arg7: memref<8x128xf32, #tpu.memory_space<vmem>>) attributes {dimension_semantics = [#tpu.dimension_semantics<parallel>], iteration_bounds = array<i64: 1>, scalar_prefetch = 0 : i64, scratch_operands = 1 : i64, tpu.core_type = #tpu.core_type<tc>, window_params = [{transform_indices = @transform_0, window_bounds = array<i64: 8, 64>}, {transform_indices = @transform_1, window_bounds = array<i64: 8, 1>}, {pipeline_mode = #tpu.pipeline_mode<synchronous>, transform_indices = @transform_2, window_bounds = array<i64: 3, 64, 32>}, {pipeline_mode = #tpu.pipeline_mode<synchronous>, transform_indices = @transform_3, window_bounds = array<i64: 3, 32, 128>}, {pipeline_mode = #tpu.pipeline_mode<synchronous>, transform_indices = @transform_4, window_bounds = array<i64: 3, 1, 128>}, {transform_indices = @transform_5, window_bounds = array<i64: 8, 128>}]} {
    %cst = arith.constant 0.000000e+00 : f32
    %0 = vector.broadcast %cst : f32 to vector<8x128xf32>
    %c0 = arith.constant 0 : index
    %c0_0 = arith.constant 0 : index
    %1 = vector.load %arg7[%c0, %c0_0] : memref<8x128xf32, #tpu.memory_space<vmem>>, vector<8x128xf32>
    tpu.vector_store %arg7[%c0, %c0_0], %0 {strides = array<i32>} : memref<8x128xf32, #tpu.memory_space<vmem>>, vector<8x128xf32>,
    %c0_1 = arith.constant 0 : index
    %c0_2 = arith.constant 0 : index
    %2 = vector.load %arg1[%c0_1, %c0_2] : memref<8x64xbf16, #tpu.memory_space<vmem>>, vector<8x64xbf16>
    %c0_3 = arith.constant 0 : index
    %c0_4 = arith.constant 0 : index
    %3 = vector.load %arg2[%c0_3, %c0_4] : memref<8x1xf32, #tpu.memory_space<vmem>>, vector<8x1xf32>
    %c0_5 = arith.constant 0 : index
    %c0_6 = arith.constant 0 : index
    %c0_7 = arith.constant 0 : index
    %4 = vector.load %arg3[%c0_5, %c0_6, %c0_7] : memref<3x64x32xbf16, #tpu.memory_space<vmem>>, vector<1x64x32xbf16>
    %5 = vector.shape_cast %4 : vector<1x64x32xbf16> to vector<64x32xbf16>
    %cst_8 = arith.constant dense<0.000000e+00> : vector<8x32xf32>
    %6 = tpu.matmul %2, %5, %cst_8 {dimension_numbers = #tpu.dot_dimension_numbers<[1], [0], [0], [1], [0, 0, 1, 1], [], []>} : vector<8x64xbf16>, vector<64x32xbf16>, vector<8x32xf32> -> vector<8x32xf32>
    %7 = vector.broadcast %3 : vector<8x1xf32> to vector<8x32xf32>
    %8 = arith.mulf %6, %7 : vector<8x32xf32>
    %9 = arith.truncf %8 : vector<8x32xf32> to vector<8x32xbf16>
    %c0_9 = arith.constant 0 : index
    %c0_10 = arith.constant 0 : index
    %c0_11 = arith.constant 0 : index
    %10 = vector.load %arg4[%c0_9, %c0_10, %c0_11] : memref<3x32x128xbf16, #tpu.memory_space<vmem>>, vector<1x32x128xbf16>
    %11 = vector.shape_cast %10 : vector<1x32x128xbf16> to vector<32x128xbf16>
    %cst_12 = arith.constant dense<0.000000e+00> : vector<8x128xf32>
    %12 = tpu.matmul %9, %11, %cst_12 {dimension_numbers = #tpu.dot_dimension_numbers<[1], [0], [0], [1], [0, 0, 1, 1], [], []>} : vector<8x32xbf16>, vector<32x128xbf16>, vector<8x128xf32> -> vector<8x128xf32>
    %c0_13 = arith.constant 0 : index
    %c0_14 = arith.constant 0 : index
    %c0_15 = arith.constant 0 : index
    %13 = vector.load %arg5[%c0_13, %c0_14, %c0_15] : memref<3x1x128xf32, #tpu.memory_space<vmem>>, vector<1x1x128xf32>
    %14 = vector.shape_cast %13 : vector<1x1x128xf32> to vector<1x128xf32>
    %15 = vector.broadcast %14 : vector<1x128xf32> to vector<8x128xf32>
    %16 = arith.addf %12, %15 : vector<8x128xf32>
    %cst_16 = arith.constant dense<0xFF800000> : vector<8xf32>
    %17 = vector.multi_reduction <maximumf>, %16, %cst_16 [1] : vector<8x128xf32> to vector<8xf32>
    %18 = vector.shape_cast %17 : vector<8xf32> to vector<8x1xf32>
    %19 = vector.broadcast %18 : vector<8x1xf32> to vector<8x128xf32>
    %20 = arith.subf %16, %19 : vector<8x128xf32>
    %21 = math.exp %20 : vector<8x128xf32>
    %cst_17 = arith.constant dense<0.000000e+00> : vector<8xf32>
    %22 = vector.multi_reduction <add>, %21, %cst_17 [1] : vector<8x128xf32> to vector<8xf32>
    %23 = vector.shape_cast %22 : vector<8xf32> to vector<8x1xf32>
    %24 = vector.broadcast %23 : vector<8x1xf32> to vector<8x128xf32>
    %25 = arith.divf %21, %24 : vector<8x128xf32>
    %c0_18 = arith.constant 0 : index
    %c0_19 = arith.constant 0 : index
    %26 = vector.load %arg7[%c0_18, %c0_19] : memref<8x128xf32, #tpu.memory_space<vmem>>, vector<8x128xf32>
    %27 = arith.addf %26, %25 : vector<8x128xf32>
    %c0_20 = arith.constant 0 : index
    %c0_21 = arith.constant 0 : index
    %28 = vector.load %arg7[%c0_20, %c0_21] : memref<8x128xf32, #tpu.memory_space<vmem>>, vector<8x128xf32>
    tpu.vector_store %arg7[%c0_20, %c0_21], %27 {strides = array<i32>} : memref<8x128xf32, #tpu.memory_space<vmem>>, vector<8x128xf32>,
    %c1 = arith.constant 1 : index
    %c0_22 = arith.constant 0 : index
    %c0_23 = arith.constant 0 : index
    %29 = vector.load %arg3[%c1, %c0_22, %c0_23] : memref<3x64x32xbf16, #tpu.memory_space<vmem>>, vector<1x64x32xbf16>
    %30 = vector.shape_cast %29 : vector<1x64x32xbf16> to vector<64x32xbf16>
    %cst_24 = arith.constant dense<0.000000e+00> : vector<8x32xf32>
    %31 = tpu.matmul %2, %30, %cst_24 {dimension_numbers = #tpu.dot_dimension_numbers<[1], [0], [0], [1], [0, 0, 1, 1], [], []>} : vector<8x64xbf16>, vector<64x32xbf16>, vector<8x32xf32> -> vector<8x32xf32>
    %32 = vector.broadcast %3 : vector<8x1xf32> to vector<8x32xf32>
    %33 = arith.mulf %31, %32 : vector<8x32xf32>
    %34 = arith.truncf %33 : vector<8x32xf32> to vector<8x32xbf16>
    %c1_25 = arith.constant 1 : index
    %c0_26 = arith.constant 0 : index
    %c0_27 = arith.constant 0 : index
    %35 = vector.load %arg4[%c1_25, %c0_26, %c0_27] : memref<3x32x128xbf16, #tpu.memory_space<vmem>>, vector<1x32x128xbf16>
    %36 = vector.shape_cast %35 : vector<1x32x128xbf16> to vector<32x128xbf16>
    %cst_28 = arith.constant dense<0.000000e+00> : vector<8x128xf32>
    %37 = tpu.matmul %34, %36, %cst_28 {dimension_numbers = #tpu.dot_dimension_numbers<[1], [0], [0], [1], [0, 0, 1, 1], [], []>} : vector<8x32xbf16>, vector<32x128xbf16>, vector<8x128xf32> -> vector<8x128xf32>
    %c1_29 = arith.constant 1 : index
    %c0_30 = arith.constant 0 : index
    %c0_31 = arith.constant 0 : index
    %38 = vector.load %arg5[%c1_29, %c0_30, %c0_31] : memref<3x1x128xf32, #tpu.memory_space<vmem>>, vector<1x1x128xf32>
    %39 = vector.shape_cast %38 : vector<1x1x128xf32> to vector<1x128xf32>
    %40 = vector.broadcast %39 : vector<1x128xf32> to vector<8x128xf32>
    %41 = arith.addf %37, %40 : vector<8x128xf32>
    %cst_32 = arith.constant dense<0xFF800000> : vector<8xf32>
    %42 = vector.multi_reduction <maximumf>, %41, %cst_32 [1] : vector<8x128xf32> to vector<8xf32>
    %43 = vector.shape_cast %42 : vector<8xf32> to vector<8x1xf32>
    %44 = vector.broadcast %43 : vector<8x1xf32> to vector<8x128xf32>
    %45 = arith.subf %41, %44 : vector<8x128xf32>
    %46 = math.exp %45 : vector<8x128xf32>
    %cst_33 = arith.constant dense<0.000000e+00> : vector<8xf32>
    %47 = vector.multi_reduction <add>, %46, %cst_33 [1] : vector<8x128xf32> to vector<8xf32>
    %48 = vector.shape_cast %47 : vector<8xf32> to vector<8x1xf32>
    %49 = vector.broadcast %48 : vector<8x1xf32> to vector<8x128xf32>
    %50 = arith.divf %46, %49 : vector<8x128xf32>
    %c0_34 = arith.constant 0 : index
    %c0_35 = arith.constant 0 : index
    %51 = vector.load %arg7[%c0_34, %c0_35] : memref<8x128xf32, #tpu.memory_space<vmem>>, vector<8x128xf32>
    %52 = arith.addf %51, %50 : vector<8x128xf32>
    %c0_36 = arith.constant 0 : index
    %c0_37 = arith.constant 0 : index
    %53 = vector.load %arg7[%c0_36, %c0_37] : memref<8x128xf32, #tpu.memory_space<vmem>>, vector<8x128xf32>
    tpu.vector_store %arg7[%c0_36, %c0_37], %52 {strides = array<i32>} : memref<8x128xf32, #tpu.memory_space<vmem>>, vector<8x128xf32>,
    %c2 = arith.constant 2 : index
    %c0_38 = arith.constant 0 : index
    %c0_39 = arith.constant 0 : index
    %54 = vector.load %arg3[%c2, %c0_38, %c0_39] : memref<3x64x32xbf16, #tpu.memory_space<vmem>>, vector<1x64x32xbf16>
    %55 = vector.shape_cast %54 : vector<1x64x32xbf16> to vector<64x32xbf16>
    %cst_40 = arith.constant dense<0.000000e+00> : vector<8x32xf32>
    %56 = tpu.matmul %2, %55, %cst_40 {dimension_numbers = #tpu.dot_dimension_numbers<[1], [0], [0], [1], [0, 0, 1, 1], [], []>} : vector<8x64xbf16>, vector<64x32xbf16>, vector<8x32xf32> -> vector<8x32xf32>
    %57 = vector.broadcast %3 : vector<8x1xf32> to vector<8x32xf32>
    %58 = arith.mulf %56, %57 : vector<8x32xf32>
    %59 = arith.truncf %58 : vector<8x32xf32> to vector<8x32xbf16>
    %c2_41 = arith.constant 2 : index
    %c0_42 = arith.constant 0 : index
    %c0_43 = arith.constant 0 : index
    %60 = vector.load %arg4[%c2_41, %c0_42, %c0_43] : memref<3x32x128xbf16, #tpu.memory_space<vmem>>, vector<1x32x128xbf16>
    %61 = vector.shape_cast %60 : vector<1x32x128xbf16> to vector<32x128xbf16>
    %cst_44 = arith.constant dense<0.000000e+00> : vector<8x128xf32>
    %62 = tpu.matmul %59, %61, %cst_44 {dimension_numbers = #tpu.dot_dimension_numbers<[1], [0], [0], [1], [0, 0, 1, 1], [], []>} : vector<8x32xbf16>, vector<32x128xbf16>, vector<8x128xf32> -> vector<8x128xf32>
    %c2_45 = arith.constant 2 : index
    %c0_46 = arith.constant 0 : index
    %c0_47 = arith.constant 0 : index
    %63 = vector.load %arg5[%c2_45, %c0_46, %c0_47] : memref<3x1x128xf32, #tpu.memory_space<vmem>>, vector<1x1x128xf32>
    %64 = vector.shape_cast %63 : vector<1x1x128xf32> to vector<1x128xf32>
    %65 = vector.broadcast %64 : vector<1x128xf32> to vector<8x128xf32>
    %66 = arith.addf %62, %65 : vector<8x128xf32>
    %cst_48 = arith.constant dense<0xFF800000> : vector<8xf32>
    %67 = vector.multi_reduction <maximumf>, %66, %cst_48 [1] : vector<8x128xf32> to vector<8xf32>
    %68 = vector.shape_cast %67 : vector<8xf32> to vector<8x1xf32>
    %69 = vector.broadcast %68 : vector<8x1xf32> to vector<8x128xf32>
    %70 = arith.subf %66, %69 : vector<8x128xf32>
    %71 = math.exp %70 : vector<8x128xf32>
    %cst_49 = arith.constant dense<0.000000e+00> : vector<8xf32>
    %72 = vector.multi_reduction <add>, %71, %cst_49 [1] : vector<8x128xf32> to vector<8xf32>
    %73 = vector.shape_cast %72 : vector<8xf32> to vector<8x1xf32>
    %74 = vector.broadcast %73 : vector<8x1xf32> to vector<8x128xf32>
    %75 = arith.divf %71, %74 : vector<8x128xf32>
    %c0_50 = arith.constant 0 : index
    %c0_51 = arith.constant 0 : index
    %76 = vector.load %arg7[%c0_50, %c0_51] : memref<8x128xf32, #tpu.memory_space<vmem>>, vector<8x128xf32>
    %77 = arith.addf %76, %75 : vector<8x128xf32>
    %c0_52 = arith.constant 0 : index
    %c0_53 = arith.constant 0 : index
    %78 = vector.load %arg7[%c0_52, %c0_53] : memref<8x128xf32, #tpu.memory_space<vmem>>, vector<8x128xf32>
    tpu.vector_store %arg7[%c0_52, %c0_53], %77 {strides = array<i32>} : memref<8x128xf32, #tpu.memory_space<vmem>>, vector<8x128xf32>,
    %c0_54 = arith.constant 0 : index
    %c0_55 = arith.constant 0 : index
    %79 = vector.load %arg7[%c0_54, %c0_55] : memref<8x128xf32, #tpu.memory_space<vmem>>, vector<8x128xf32>
    %80 = tpu.iota {dimensions = array<i32: 1>} : vector<8x128xi32>
    %cst_56 = arith.constant dense<0xFF800000> : vector<8xf32>
    %81 = vector.multi_reduction <maximumf>, %79, %cst_56 [1] : vector<8x128xf32> to vector<8xf32>
    %82 = vector.shape_cast %81 : vector<8xf32> to vector<8x1xf32>
    %83 = vector.broadcast %82 : vector<8x1xf32> to vector<8x128xf32>
    %84 = arith.cmpf oeq, %79, %83 : vector<8x128xf32>
    %c128_i32 = arith.constant 128 : i32
    %85 = vector.broadcast %c128_i32 : i32 to vector<8x128xi32>
    %86 = arith.select %84, %80, %85 : vector<8x128xi1>, vector<8x128xi32>
    %cst_57 = arith.constant dense<2147483647> : vector<8xi32>
    %87 = vector.multi_reduction <minsi>, %86, %cst_57 [1] : vector<8x128xi32> to vector<8xi32>
    %88 = vector.shape_cast %87 : vector<8xi32> to vector<8x1xi32>
    %89 = vector.shape_cast %88 : vector<8x1xi32> to vector<8x1xi32>
    %90 = vector.broadcast %89 : vector<8x1xi32> to vector<8x128xi32>
    %c0_58 = arith.constant 0 : index
    %c0_59 = arith.constant 0 : index
    %91 = vector.load %arg6[%c0_58, %c0_59] : memref<8x128xi32, #tpu.memory_space<vmem>>, vector<8x128xi32>
    tpu.vector_store %arg6[%c0_58, %c0_59], %90 {strides = array<i32>} : memref<8x128xi32, #tpu.memory_space<vmem>>, vector<8x128xi32>,
    return
  }
  func.func @transform_0(%arg0: i32) -> (i32, i32) {
    %c0_i32 = arith.constant 0 : i32
    %c0_i32_0 = arith.constant 0 : i32
    return %arg0, %c0_i32 : i32, i32
  }
  func.func @transform_1(%arg0: i32) -> (i32, i32) {
    %c0_i32 = arith.constant 0 : i32
    %c0_i32_0 = arith.constant 0 : i32
    return %arg0, %c0_i32 : i32, i32
  }
  func.func @transform_2(%arg0: i32) -> (i32, i32, i32) {
    %c0_i32 = arith.constant 0 : i32
    %c0_i32_0 = arith.constant 0 : i32
    %c0_i32_1 = arith.constant 0 : i32
    %c0_i32_2 = arith.constant 0 : i32
    return %c0_i32, %c0_i32_0, %c0_i32_1 : i32, i32, i32
  }
  func.func @transform_3(%arg0: i32) -> (i32, i32, i32) {
    %c0_i32 = arith.constant 0 : i32
    %c0_i32_0 = arith.constant 0 : i32
    %c0_i32_1 = arith.constant 0 : i32
    %c0_i32_2 = arith.constant 0 : i32
    return %c0_i32, %c0_i32_0, %c0_i32_1 : i32, i32, i32
  }
  func.func @transform_4(%arg0: i32) -> (i32, i32, i32) {
    %c0_i32 = arith.constant 0 : i32
    %c0_i32_0 = arith.constant 0 : i32
    %c0_i32_1 = arith.constant 0 : i32
    %c0_i32_2 = arith.constant 0 : i32
    return %c0_i32, %c0_i32_0, %c0_i32_1 : i32, i32, i32
  }
  func.func @transform_5(%arg0: i32) -> (i32, i32) {
    %c0_i32 = arith.constant 0 : i32
    %c0_i32_0 = arith.constant 0 : i32
    return %arg0, %c0_i32 : i32, i32
  }
}

</mosaic_0001>

<llo_original>
// kernel: ensemble_forward.1
$region0: #{ensemble_forward.1}
  #allocation0 [shape = 'u32[]', space=smem, size = 0x4, offset = 0x4, fixed_abs, tag = 'smem constant byte address 0x4 - core index']
  #allocation1 [shape = 'u32[72,128]{1,0:T(1,128)}', space=vmem, size = 0x9000, scoped, tag = 'internal scratch']
  #allocation2 [shape = 'f32[8,128]{1,0:T(8,128)}', space=vmem, size = 0x1000, scoped, tag = 'scratch operand']
  %s0 = inlined_call_operand.vmem [shape: bf16[8,64], index: 0, kind: input, shape index: {}]
  %s1 = inlined_call_operand.vmem [shape: f32[8,1], index: 1, kind: input, shape index: {}]
  %s2 = inlined_call_operand.vmem [shape: bf16[3,64,32], index: 2, kind: input, shape index: {}]
  %s3 = inlined_call_operand.vmem [shape: bf16[3,32,128], index: 3, kind: input, shape index: {}]
  %s4 = inlined_call_operand.vmem [shape: f32[3,1,128], index: 4, kind: input, shape index: {}]
  %s5 = inlined_call_operand.vmem [shape: s32[8,128], index: 5, kind: output, shape index: {}]
  %s6 = sld [smem:[#allocation0]]
  $region30: #{ensemble_forward.1} parent=0
    _
  %s8 = ssub.s32 1, %s6
  %s9 = scalar_select 0, %s8, %s6
  // Predicated region
  $region2: #{ensemble_forward.1} parent=0 // pred_check
    _
  $region3: #{ensemble_forward.1} parent=0 // pred_check_branch
    %11 = sbr.rel (0) target = $region5
  $region4: #{ensemble_forward.1} parent=0 // pred_region
    _
  $region5: #{ensemble_forward.1} parent=0 // pred_fallthru
    _
  // Predicated region
  $region6: #{ensemble_forward.1} parent=0 // pred_check
    _
  $region7: #{ensemble_forward.1} parent=0 // pred_check_branch
    %13 = sbr.rel (0) target = $region9
  $region8: #{ensemble_forward.1} parent=0 // pred_region
    _
  $region9: #{ensemble_forward.1} parent=0 // pred_fallthru
    _
  // Predicated region
  $region10: #{ensemble_forward.1} parent=0 // pred_check
    _
  $region11: #{ensemble_forward.1} parent=0 // pred_check_branch
    %15 = sbr.rel (0) target = $region13
  $region12: #{ensemble_forward.1} parent=0 // pred_region
    _
  $region13: #{ensemble_forward.1} parent=0 // pred_fallthru
    _
  // Predicated region
  $region14: #{ensemble_forward.1} parent=0 // pred_check
    _
  $region15: #{ensemble_forward.1} parent=0 // pred_check_branch
    %17 = sbr.rel (0) target = $region17
  $region16: #{ensemble_forward.1} parent=0 // pred_region
    _
  $region17: #{ensemble_forward.1} parent=0 // pred_fallthru
    _
  // Predicated region
  $region18: #{ensemble_forward.1} parent=0 // pred_check
    _
  $region19: #{ensemble_forward.1} parent=0 // pred_check_branch
    %19 = sbr.rel (0) target = $region21
  $region20: #{ensemble_forward.1} parent=0 // pred_region
    _
  $region21: #{ensemble_forward.1} parent=0 // pred_fallthru
    _
  %21 = vst [vmem:[#allocation2] sm:$0xff] 0.0
  %v22 = vld [vmem:[%s0] sm:$0xf]
  %v23 = vld [vmem:[%s1] sm:$0xff]
  %v24 = vld [vmem:[%s2] sm:$0xf]
  %v25 = vld [vmem:[%s2 + $0x4] sm:$0xf]
  %v26 = vld [vmem:[%s2 + $0x8] sm:$0xf]
  %v27 = vld [vmem:[%s2 + $0xc] sm:$0xf]
  %v28 = vld [vmem:[%s2 + $0x10] sm:$0xf]
  %v29 = vld [vmem:[%s2 + $0x14] sm:$0xf]
  %v30 = vld [vmem:[%s2 + $0x18] sm:$0xf]
  %v31 = vld [vmem:[%s2 + $0x1c] sm:$0xf]
  %v40 = vunpack.c.l.b16 %v24
  %v41 = vunpack.c.l.b16 %v25
  %v42 = vunpack.c.l.b16 %v26
  %v43 = vunpack.c.l.b16 %v27
  %v44 = vunpack.c.l.b16 %v28
  %v45 = vunpack.c.l.b16 %v29
  %v46 = vunpack.c.l.b16 %v30
  %v47 = vunpack.c.l.b16 %v31
  %v48 = vpack.c.b16 %v41, %v40
  %v49 = vpack.c.b16 %v43, %v42
  %v50 = vpack.c.b16 %v45, %v44
  %v51 = vpack.c.b16 %v47, %v46
  %vm56 = vcmask 523264
  %v58 = vsel %vm56, %v22, 0
  %60 = vmatpush.bf16.msra.mxu0 0
  %61 = vmatpush.bf16.msra.mxu0 0
  %62 = vmatpush.bf16.msra.mxu0 0
  %63 = vmatpush.bf16.msra.mxu0 0
  %64 = vmatpush.bf16.msra.mxu0 %v51
  %65 = vmatpush.bf16.msra.mxu0 %v50
  %66 = vmatpush.bf16.msra.mxu0 %v49
  %67 = vmatpush.bf16.msra.mxu0 %v48
  %68 = vmatmul.bf16.gmra.mxu0 %v58
  %v69 = vpop.f32.mrf.mxu0
  %v70 = vadd.f32 0.0, %v69
  %v71 = vpop.f32.mrf.mxu0
  %72 = vdwg.mxu0
  %74 = vset.pattern.permute.xlu0 0
  %75 = vperm.xlu0 %74, %v23
  %v76 = vpop.permute.xlu0 %75
  %v78 = vmul.f32 %v70, %v76
  %v79 = vpack.c.bf16 %v78, %v78
  %v80 = vld [vmem:[%s3] sm:$0xf]
  %v81 = vld [vmem:[%s3 + $0x4] sm:$0xf]
  %v82 = vld [vmem:[%s3 + $0x8] sm:$0xf]
  %v83 = vld [vmem:[%s3 + $0xc] sm:$0xf]
  %v84 = vld [vmem:[%s4] sm:$0x1]
  %v86 = vperm.slane %v84, 0
  %v92 = vunpack.c.l.b16 %v80
  %v93 = vunpack.c.l.b16 %v81
  %v94 = vunpack.c.l.b16 %v82
  %v95 = vunpack.c.l.b16 %v83
  %v96 = vpack.c.b16 %v93, %v92
  %v97 = vpack.c.b16 %v95, %v94
  %vm100 = vcmask 261120
  %v102 = vsel %vm100, %v79, 0
  %104 = vmatpush.bf16.msra.mxu0 0
  %105 = vmatpush.bf16.msra.mxu0 0
  %106 = vmatpush.bf16.msra.mxu0 0
  %107 = vmatpush.bf16.msra.mxu0 0
  %108 = vmatpush.bf16.msra.mxu0 0
  %109 = vmatpush.bf16.msra.mxu0 0
  %110 = vmatpush.bf16.msra.mxu0 %v97
  %111 = vmatpush.bf16.msra.mxu0 %v96
  %112 = vmatmul.bf16.gmra.mxu0 %v102
  %v113 = vpop.f32.mrf.mxu0
  %v114 = vadd.f32 %v86, %v113
  %v115 = vpop.f32.mrf.mxu0
  %116 = vdwg.mxu0
  %117 = vmax.xlane.f32.xlu0 %v114
  %v118 = vpop.xlane.xlu0 %117
  %v119 = vsub.f32 %v114, %v118
  %v120 = vmul.f32 %v119, 1.442695
  %v121 = vpow.pop %v120
  %122 = vadd.xlane.f32.xlu0 %v121
  %v123 = vpop.xlane.xlu0 %122
  %v124 = vrcp.pop %v123
  %v125 = vmul.f32 %v123, %v124
  %v126 = vsub.f32 1.0, %v125
  %v127 = vmul.f32 %v124, %v126
  %v128 = vadd.f32 %v124, %v127
  %vm129 = vweird.f32 %v123
  %vm130 = vweird.f32 %v124
  %vm131 = vmor %vm129, %vm130
  %v132 = vsel %vm131, %v124, %v128
  %v133 = vand.u32 2147483647, %v123
  %vm134 = vcmp.eq.f32.partialorder %v133, 8.507059e+37
  %v135 = vand.u32 %v123, 2147483648
  %v136 = vor.u32 1.1754944e-38, %v135
  %v137 = vsel %vm134, %v136, %v132
  %v138 = vmul.f32 %v121, %v137
  %v139 = vld [vmem:[#allocation2] sm:$0xff]
  %v140 = vadd.f32 %v139, %v138
  %141 = vst [vmem:[#allocation2] sm:$0xff] %v140
  %s142 = scalar_lea.vmem %s2, 32
  %v143 = vld [vmem:[%s142] sm:$0xf]
  %v144 = vld [vmem:[%s142 + $0x4] sm:$0xf]
  %v145 = vld [vmem:[%s142 + $0x8] sm:$0xf]
  %v146 = vld [vmem:[%s142 + $0xc] sm:$0xf]
  %v147 = vld [vmem:[%s142 + $0x10] sm:$0xf]
  %v148 = vld [vmem:[%s142 + $0x14] sm:$0xf]
  %v149 = vld [vmem:[%s142 + $0x18] sm:$0xf]
  %v150 = vld [vmem:[%s142 + $0x1c] sm:$0xf]
  %v159 = vunpack.c.l.b16 %v143
  %v160 = vunpack.c.l.b16 %v144
  %v161 = vunpack.c.l.b16 %v145
  %v162 = vunpack.c.l.b16 %v146
  %v163 = vunpack.c.l.b16 %v147
  %v164 = vunpack.c.l.b16 %v148
  %v165 = vunpack.c.l.b16 %v149
  %v166 = vunpack.c.l.b16 %v150
  %v167 = vpack.c.b16 %v160, %v159
  %v168 = vpack.c.b16 %v162, %v161
  %v169 = vpack.c.b16 %v164, %v163
  %v170 = vpack.c.b16 %v166, %v165
  %175 = vmatpush.bf16.msra.mxu0 0
  %176 = vmatpush.bf16.msra.mxu0 0
  %177 = vmatpush.bf16.msra.mxu0 0
  %178 = vmatpush.bf16.msra.mxu0 0
  %179 = vmatpush.bf16.msra.mxu0 %v170
  %180 = vmatpush.bf16.msra.mxu0 %v169
  %181 = vmatpush.bf16.msra.mxu0 %v168
  %182 = vmatpush.bf16.msra.mxu0 %v167
  %183 = vmatmul.bf16.gmra.mxu0 %v58
  %v184 = vpop.f32.mrf.mxu0
  %v185 = vadd.f32 0.0, %v184
  %v186 = vpop.f32.mrf.mxu0
  %187 = vdwg.mxu0
  %v188 = vmul.f32 %v185, %v76
  %v189 = vpack.c.bf16 %v188, %v188
  %s190 = scalar_lea.vmem %s3, 16
  %v191 = vld [vmem:[%s190] sm:$0xf]
  %v192 = vld [vmem:[%s190 + $0x4] sm:$0xf]
  %v193 = vld [vmem:[%s190 + $0x8] sm:$0xf]
  %v194 = vld [vmem:[%s190 + $0xc] sm:$0xf]
  %s195 = scalar_lea.vmem %s4, 1
  %v196 = vld [vmem:[%s195] sm:$0x1]
  %v198 = vperm.slane %v196, 0
  %v204 = vunpack.c.l.b16 %v191
  %v205 = vunpack.c.l.b16 %v192
  %v206 = vunpack.c.l.b16 %v193
  %v207 = vunpack.c.l.b16 %v194
  %v208 = vpack.c.b16 %v205, %v204
  %v209 = vpack.c.b16 %v207, %v206
  %v213 = vsel %vm100, %v189, 0
  %215 = vmatpush.bf16.msra.mxu0 0
  %216 = vmatpush.bf16.msra.mxu0 0
  %217 = vmatpush.bf16.msra.mxu0 0
  %218 = vmatpush.bf16.msra.mxu0 0
  %219 = vmatpush.bf16.msra.mxu0 0
  %220 = vmatpush.bf16.msra.mxu0 0
  %221 = vmatpush.bf16.msra.mxu0 %v209
  %222 = vmatpush.bf16.msra.mxu0 %v208
  %223 = vmatmul.bf16.gmra.mxu0 %v213
  %v224 = vpop.f32.mrf.mxu0
  %v225 = vadd.f32 %v198, %v224
  %v226 = vpop.f32.mrf.mxu0
  %227 = vdwg.mxu0
  %228 = vmax.xlane.f32.xlu0 %v225
  %v229 = vpop.xlane.xlu0 %228
  %v230 = vsub.f32 %v225, %v229
  %v231 = vmul.f32 %v230, 1.442695
  %v232 = vpow.pop %v231
  %233 = vadd.xlane.f32.xlu0 %v232
  %v234 = vpop.xlane.xlu0 %233
  %v235 = vrcp.pop %v234
  %v236 = vmul.f32 %v234, %v235
  %v237 = vsub.f32 1.0, %v236
  %v238 = vmul.f32 %v235, %v237
  %v239 = vadd.f32 %v235, %v238
  %vm240 = vweird.f32 %v234
  %vm241 = vweird.f32 %v235
  %vm242 = vmor %vm240, %vm241
  %v243 = vsel %vm242, %v235, %v239
  %v244 = vand.u32 2147483647, %v234
  %vm245 = vcmp.eq.f32.partialorder %v244, 8.507059e+37
  %v246 = vand.u32 %v234, 2147483648
  %v247 = vor.u32 1.1754944e-38, %v246
  %v248 = vsel %vm245, %v247, %v243
  %v249 = vmul.f32 %v232, %v248
  %v250 = vld [vmem:[#allocation2] sm:$0xff]
  %v251 = vadd.f32 %v250, %v249
  %252 = vst [vmem:[#allocation2] sm:$0xff] %v251
  %s253 = scalar_lea.vmem %s2, 64
  %v254 = vld [vmem:[%s253] sm:$0xf]
  %v255 = vld [vmem:[%s253 + $0x4] sm:$0xf]
  %v256 = vld [vmem:[%s253 + $0x8] sm:$0xf]
  %v257 = vld [vmem:[%s253 + $0xc] sm:$0xf]
  %v258 = vld [vmem:[%s253 + $0x10] sm:$0xf]
  %v259 = vld [vmem:[%s253 + $0x14] sm:$0xf]
  %v260 = vld [vmem:[%s253 + $0x18] sm:$0xf]
  %v261 = vld [vmem:[%s253 + $0x1c] sm:$0xf]
  %v270 = vunpack.c.l.b16 %v254
  %v271 = vunpack.c.l.b16 %v255
  %v272 = vunpack.c.l.b16 %v256
  %v273 = vunpack.c.l.b16 %v257
  %v274 = vunpack.c.l.b16 %v258
  %v275 = vunpack.c.l.b16 %v259
  %v276 = vunpack.c.l.b16 %v260
  %v277 = vunpack.c.l.b16 %v261
  %v278 = vpack.c.b16 %v271, %v270
  %v279 = vpack.c.b16 %v273, %v272
  %v280 = vpack.c.b16 %v275, %v274
  %v281 = vpack.c.b16 %v277, %v276
  %286 = vmatpush.bf16.msra.mxu0 0
  %287 = vmatpush.bf16.msra.mxu0 0
  %288 = vmatpush.bf16.msra.mxu0 0
  %289 = vmatpush.bf16.msra.mxu0 0
  %290 = vmatpush.bf16.msra.mxu0 %v281
  %291 = vmatpush.bf16.msra.mxu0 %v280
  %292 = vmatpush.bf16.msra.mxu0 %v279
  %293 = vmatpush.bf16.msra.mxu0 %v278
  %294 = vmatmul.bf16.gmra.mxu0 %v58
  %v295 = vpop.f32.mrf.mxu0
  %v296 = vadd.f32 0.0, %v295
  %v297 = vpop.f32.mrf.mxu0
  %298 = vdwg.mxu0
  %v299 = vmul.f32 %v296, %v76
  %v300 = vpack.c.bf16 %v299, %v299
  %s301 = scalar_lea.vmem %s3, 32
  %v302 = vld [vmem:[%s301] sm:$0xf]
  %v303 = vld [vmem:[%s301 + $0x4] sm:$0xf]
  %v304 = vld [vmem:[%s301 + $0x8] sm:$0xf]
  %v305 = vld [vmem:[%s301 + $0xc] sm:$0xf]
  %s306 = scalar_lea.vmem %s4, 2
  %v307 = vld [vmem:[%s306] sm:$0x1]
  %v309 = vperm.slane %v307, 0
  %v315 = vunpack.c.l.b16 %v302
  %v316 = vunpack.c.l.b16 %v303
  %v317 = vunpack.c.l.b16 %v304
  %v318 = vunpack.c.l.b16 %v305
  %v319 = vpack.c.b16 %v316, %v315
  %v320 = vpack.c.b16 %v318, %v317
  %v324 = vsel %vm100, %v300, 0
  %326 = vmatpush.bf16.msra.mxu0 0
  %327 = vmatpush.bf16.msra.mxu0 0
  %328 = vmatpush.bf16.msra.mxu0 0
  %329 = vmatpush.bf16.msra.mxu0 0
  %330 = vmatpush.bf16.msra.mxu0 0
  %331 = vmatpush.bf16.msra.mxu0 0
  %332 = vmatpush.bf16.msra.mxu0 %v320
  %333 = vmatpush.bf16.msra.mxu0 %v319
  %334 = vmatmul.bf16.gmra.mxu0 %v324
  %v335 = vpop.f32.mrf.mxu0
  %v336 = vadd.f32 %v309, %v335
  %v337 = vpop.f32.mrf.mxu0
  %338 = vdwg.mxu0
  %339 = vmax.xlane.f32.xlu0 %v336
  %v340 = vpop.xlane.xlu0 %339
  %v341 = vsub.f32 %v336, %v340
  %v342 = vmul.f32 %v341, 1.442695
  %v343 = vpow.pop %v342
  %344 = vadd.xlane.f32.xlu0 %v343
  %v345 = vpop.xlane.xlu0 %344
  %v346 = vrcp.pop %v345
  %v347 = vmul.f32 %v345, %v346
  %v348 = vsub.f32 1.0, %v347
  %v349 = vmul.f32 %v346, %v348
  %v350 = vadd.f32 %v346, %v349
  %vm351 = vweird.f32 %v345
  %vm352 = vweird.f32 %v346
  %vm353 = vmor %vm351, %vm352
  %v354 = vsel %vm353, %v346, %v350
  %v355 = vand.u32 2147483647, %v345
  %vm356 = vcmp.eq.f32.partialorder %v355, 8.507059e+37
  %v357 = vand.u32 %v345, 2147483648
  %v358 = vor.u32 1.1754944e-38, %v357
  %v359 = vsel %vm356, %v358, %v354
  %v360 = vmul.f32 %v343, %v359
  %v361 = vld [vmem:[#allocation2] sm:$0xff]
  %v362 = vadd.f32 %v361, %v360
  %363 = vst [vmem:[#allocation2] sm:$0xff] %v362
  %v364 = vld [vmem:[#allocation2] sm:$0xff]
  %v365 = vlaneseq
  %v366 = vand.u32 %v365, 127
  %367 = vmax.xlane.f32.xlu0 %v364
  %v368 = vpop.xlane.xlu0 %367
  %vm369 = vcmp.eq.f32.partialorder %v364, %v368
  %v370 = vsel %vm369, %v366, 128
  %v371 = vand.u32 %v370, 65535
  %v372 = vshra.s32 %v370, 16
  %v373 = vcvt.s32.f32 %v371
  %v374 = vcvt.s32.f32 %v372
  %375 = vmin.xlane.f32.xlu0 %v374
  %v376 = vpop.xlane.xlu0 %375
  %vm377 = vcmp.eq.f32.partialorder %v374, %v376
  %v378 = vsel %vm377, %v373, inf
  %379 = vmin.xlane.f32.xlu0 %v378
  %v380 = vpop.xlane.xlu0 %379
  %v381 = vcvt.f32.s32 %v380
  %v382 = vcvt.f32.s32 %v376
  %v383 = vshll.u32 %v382, 16
  %v384 = vadd.s32 %v383, %v381
  %385 = vst [vmem:[%s5] sm:$0xff] %v384
  // Predicated region
  $region22: #{ensemble_forward.1} parent=0 // pred_check
    _
  $region23: #{ensemble_forward.1} parent=0 // pred_check_branch
    %387 = sbr.rel (0) target = $region25
  $region24: #{ensemble_forward.1} parent=0 // pred_region
    _
  $region25: #{ensemble_forward.1} parent=0 // pred_fallthru
    _
  // Predicated region
  $region26: #{ensemble_forward.1} parent=0 // pred_check
    _
  $region27: #{ensemble_forward.1} parent=0 // pred_check_branch
    %389 = sbr.rel (0) target = $region29
  $region28: #{ensemble_forward.1} parent=0 // pred_region
    _
  $region29: #{ensemble_forward.1} parent=0 // pred_fallthru
    _

</llo_original>
